<compile_context>
chip_gen: v7x
topology: tpu7x:2x2x1
jax: 0.10.0
libtpu: 0.0.40
codegen_flags: <defaults>
</compile_context>

<pallas_src>
import functools

import jax
import jax.numpy as jnp
from jax import lax
from jax.experimental import pallas as pl
from jax.experimental.pallas import tpu as pltpu


def _round_up(x, m):
    return (x + m - 1) // m * m


def _cdiv(a, b):
    return -(-a // b)


def _choose_l_tile(L, pad, max_l_tile):
    """Lane-dense L tile: multiple of 128 unless a single tile covers all of L."""
    if L <= max_l_tile:
        return L                       # one tile: block == full dim, no 128 constraint
    nt = _cdiv(L, max_l_tile)
    tl = _round_up(_cdiv(L, nt), 128)
    if pad > tl:                       # huge dilation: halo must fit in one neighbor tile
        tl = _round_up(pad, 128)
    return tl


def _gdc_kernel(*refs, tl, c_in_p, co_p, k, dilation, pad, epi_dtype):
    """One (batch, L-tile) grid step.

    refs (pad > 0):  x, halo, w, b, out
    refs (pad == 0): x, w, b, out
      x    : (1, c_in_p, tl)        compute dtype, main input tile (channels = sublanes)
      halo : (1, 1, c_in_p, 2*pad)  compute dtype, [left pad cols | right pad cols]
      w    : (k, 2*co_p, c_in_p)    compute dtype, tap-major weights
      b    : (2*co_p, 1)            f32 bias
      out  : (1, co_p, tl)          output dtype
    """
    if pad > 0:
        x_ref, halo_ref, w_ref, b_ref, o_ref = refs
    else:
        x_ref, w_ref, b_ref, o_ref = refs

    x = x_ref[0]                                           # (c_in_p, tl)
    if pad > 0:
        h = halo_ref[0, 0]                                 # (c_in_p, 2*pad)
        win = jnp.concatenate([h[:, :pad], x, h[:, pad:]], axis=-1)   # (c_in_p, tl+2*pad)
    else:
        win = x

    # K accumulating MXU matmuls (no im2col concat); acc stays in f32 vregs.
    acc = None
    for t in range(k):
        tap = win[:, t * dilation: t * dilation + tl]      # (c_in_p, tl), static lane shift
        part = jnp.dot(w_ref[t], tap, preferred_element_type=jnp.float32)
        acc = part if acc is None else acc + part          # (2*co_p, tl)

    acc = acc + b_ref[...]                                 # f32 bias, broadcast over lanes

    z1 = acc[:co_p, :].astype(epi_dtype)                   # sublane-aligned split
    z2 = acc[co_p:, :].astype(epi_dtype)
    # sigmoid(x) == 0.5*(1 + tanh(0.5*x)): one EUP op kind, no exp + divide.
    gate = 0.5 * (1.0 + jnp.tanh(0.5 * z2))
    o_ref[0] = (jnp.tanh(z1) * gate).astype(o_ref.dtype)


def gated_dilated_conv(x_ncl, weight_oik, bias, *, dilation,
                       compute_dtype=jnp.bfloat16, epilogue_dtype=None,
                       max_l_tile=1024):
    """x_ncl: (B, C, L); weight_oik: (2C, C, K) [PyTorch Conv1d layout]; bias: (2C,)."""
    B, C, L = x_ncl.shape
    O, Ci, K = weight_oik.shape
    assert Ci == C and O == 2 * C
    # PyTorch's output length equals L only when (K-1)*dilation is even.
    assert ((K - 1) * dilation) % 2 == 0, "unsupported: output length would differ from input"
    pad = (K - 1) * dilation // 2
    out_dtype = x_ncl.dtype
    epi_dtype = compute_dtype if epilogue_dtype is None else epilogue_dtype

    # Channels padded only to the sublane packing of their dtype (8 rows for
    # 4-byte, 16 rows for 2-byte) -- NOT to 128; L carries the lane dimension.
    sub_in = 16 if jnp.dtype(compute_dtype).itemsize == 2 else 8
    sub_out = 16 if jnp.dtype(out_dtype).itemsize == 2 else 8
    c_in_p = _round_up(C, sub_in)
    co_p = _round_up(C, sub_out)

    tl = _choose_l_tile(L, pad, max_l_tile)
    L_t = _round_up(L, tl)
    nl = L_t // tl
    assert L_t % tl == 0 and (nl == 1 or (tl % 128 == 0 and pad <= tl))

    # ---- host-side layout prep (everything stays at sublane channel width) ----
    # TODO(synk): carry the (B, c_in_p, L_t)-padded activations through the
    # surrounding model to drop this pad and the final slice entirely.
    x_p = jnp.pad(x_ncl, ((0, 0), (0, c_in_p - C), (0, L_t - L))).astype(compute_dtype)

    args = [x_p]
    in_specs = [pl.BlockSpec((1, c_in_p, tl), lambda b, i: (b, 0, i))]

    if pad > 0:
        # Tiny per-tile halo side array: halo[b, i] = [last pad cols of tile i-1 |
        # first pad cols of tile i+1]; zeros at the sequence boundaries.
        if nl > 1:
            xr = x_p.reshape(B, c_in_p, nl, tl)
            zc = jnp.zeros((B, c_in_p, 1, pad), compute_dtype)
            left = jnp.concatenate([zc, xr[:, :, :-1, tl - pad:]], axis=2)
            right = jnp.concatenate([xr[:, :, 1:, :pad], zc], axis=2)
            halo = jnp.transpose(jnp.concatenate([left, right], axis=3), (0, 2, 1, 3))
        else:
            halo = jnp.zeros((B, 1, c_in_p, 2 * pad), compute_dtype)
        args.append(halo)
        in_specs.append(pl.BlockSpec((1, 1, c_in_p, 2 * pad), lambda b, i: (b, i, 0, 0)))

    # Weights: (2C, C, K) -> tap-major (K, 2*co_p, c_in_p); z1 out-channels in
    # rows [0, C), z2 out-channels in rows [co_p, co_p + C).  Zero padding in
    # the unused rows/cols contributes exact zeros.
    w_t = jnp.transpose(weight_oik, (2, 0, 1)).astype(compute_dtype)   # (K, 2C, C)
    w_arr = jnp.zeros((K, 2 * co_p, c_in_p), compute_dtype)
    w_arr = w_arr.at[:, :C, :C].set(w_t[:, :C, :])
    w_arr = w_arr.at[:, co_p:co_p + C, :C].set(w_t[:, C:, :])

    b_arr = jnp.zeros((2 * co_p, 1), jnp.float32)
    b_arr = b_arr.at[:C, 0].set(bias[:C].astype(jnp.float32))
    b_arr = b_arr.at[co_p:co_p + C, 0].set(bias[C:].astype(jnp.float32))

    args += [w_arr, b_arr]
    in_specs += [
        pl.BlockSpec((K, 2 * co_p, c_in_p), lambda b, i: (0, 0, 0)),   # constant block
        pl.BlockSpec((2 * co_p, 1), lambda b, i: (0, 0)),              # constant block
    ]

    kernel = functools.partial(_gdc_kernel, tl=tl, c_in_p=c_in_p, co_p=co_p,
                               k=K, dilation=dilation, pad=pad, epi_dtype=epi_dtype)

    out_full = pl.pallas_call(
        kernel,
        out_shape=jax.ShapeDtypeStruct((B, co_p, L_t), out_dtype),
        grid_spec=pltpu.PrefetchScalarGridSpec(
            num_scalar_prefetch=0,
            grid=(B, nl),
            in_specs=in_specs,
            out_specs=pl.BlockSpec((1, co_p, tl), lambda b, i: (b, 0, i)),
        ),
        compiler_params=pltpu.CompilerParams(
            dimension_semantics=("parallel", "parallel"),
        ),
    )(*args)

    return out_full[:, :C, :L]                                         # (B, C, L)


def _reference(x_ncl, weight_oik, bias, *, dilation):
    """Pure-JAX reference matching PyTorch Conv1d + gating semantics."""
    K = weight_oik.shape[-1]
    pad = (K - 1) * dilation // 2
    z = lax.conv_general_dilated(
        x_ncl, weight_oik,
        window_strides=(1,),
        padding=[(pad, pad)],
        rhs_dilation=(dilation,),
        dimension_numbers=("NCW", "OIW", "NCW"),
    ) + bias[None, :, None]
    C = x_ncl.shape[1]
    z1, z2 = z[:, :C, :], z[:, C:, :]
    return jnp.tanh(z1) * jax.nn.sigmoid(z2)


if __name__ == "__main__":
    # Small shapes consistent with the module: batch=2, channels=4, seq=16.
    B, C, L = 2, 4, 16
    K, dilation = 3, 2

    key = jax.random.PRNGKey(0)
    kx, kw, kb = jax.random.split(key, 3)
    x = jax.random.normal(kx, (B, C, L), dtype=jnp.float32)
    # PyTorch Conv1d parameter shapes: weight (2C, C, K), bias (2C,)
    weight = jax.random.normal(kw, (2 * C, C, K), dtype=jnp.float32) * 0.1
    bias = jax.random.normal(kb, (2 * C,), dtype=jnp.float32) * 0.1

    ref = _reference(x, weight, bias, dilation=dilation)

    # f32 MXU + f32 epilogue: tight match against the conv reference.
    out_f32 = gated_dilated_conv(x, weight, bias, dilation=dilation,
                                 compute_dtype=jnp.float32)
    out_f32 = jax.block_until_ready(out_f32)
    assert out_f32.shape == (B, C, L)
    assert jnp.allclose(out_f32, ref, atol=1e-4, rtol=1e-4)

    # Default bf16 MXU + bf16 gating epilogue (f32 accumulation / bias).
    out_bf16 = gated_dilated_conv(x, weight, bias, dilation=dilation)
    out_bf16 = jax.block_until_ready(out_bf16)
    assert out_bf16.shape == (B, C, L)
    assert jnp.allclose(out_bf16, ref, atol=3e-2, rtol=3e-2)

    # Exercise the multi-tile + ragged-L (pad-and-slice) path with halos.
    B2, C2, L2 = 2, 8, 300
    x2 = jax.random.normal(kx, (B2, C2, L2), dtype=jnp.float32)
    w2 = jax.random.normal(kw, (2 * C2, C2, K), dtype=jnp.float32) * 0.1
    b2 = jax.random.normal(kb, (2 * C2,), dtype=jnp.float32) * 0.1
    ref2 = _reference(x2, w2, b2, dilation=dilation)
    out2 = gated_dilated_conv(x2, w2, b2, dilation=dilation,
                              compute_dtype=jnp.float32, max_l_tile=128)
    out2 = jax.block_until_ready(out2)
    assert out2.shape == (B2, C2, L2)
    assert jnp.allclose(out2, ref2, atol=1e-4, rtol=1e-4)

    print("KERNEL_OK")
</pallas_src>

<mosaic_0001>
module attributes {stable_mosaic.version = 11 : i64} {
  func.func @_gdc_kernel(%arg0: i32, %arg1: i32, %arg2: memref<1x8x16xf32, #tpu.memory_space<vmem>>, %arg3: memref<1x1x8x4xf32, #tpu.memory_space<vmem>>, %arg4: memref<3x16x8xf32, #tpu.memory_space<vmem>>, %arg5: memref<16x1xf32, #tpu.memory_space<vmem>>, %arg6: memref<1x8x16xf32, #tpu.memory_space<vmem>>) attributes {dimension_semantics = [#tpu.dimension_semantics<parallel>, #tpu.dimension_semantics<parallel>], iteration_bounds = array<i64: 2, 1>, scalar_prefetch = 0 : i64, scratch_operands = 0 : i64, tpu.core_type = #tpu.core_type<tc>, window_params = [{transform_indices = @transform_0, window_bounds = array<i64: 1, 8, 16>}, {transform_indices = @transform_1, window_bounds = array<i64: 1, 1, 8, 4>}, {pipeline_mode = #tpu.pipeline_mode<synchronous>, transform_indices = @transform_2, window_bounds = array<i64: 3, 16, 8>}, {pipeline_mode = #tpu.pipeline_mode<synchronous>, transform_indices = @transform_3, window_bounds = array<i64: 16, 1>}, {transform_indices = @transform_4, window_bounds = array<i64: 1, 8, 16>}]} {
    %c0 = arith.constant 0 : index
    %c0_0 = arith.constant 0 : index
    %c0_1 = arith.constant 0 : index
    %0 = vector.load %arg2[%c0, %c0_0, %c0_1] : memref<1x8x16xf32, #tpu.memory_space<vmem>>, vector<1x8x16xf32>
    %1 = vector.shape_cast %0 : vector<1x8x16xf32> to vector<8x16xf32>
    %c0_2 = arith.constant 0 : index
    %c0_3 = arith.constant 0 : index
    %c0_4 = arith.constant 0 : index
    %c0_5 = arith.constant 0 : index
    %2 = vector.load %arg3[%c0_2, %c0_3, %c0_4, %c0_5] : memref<1x1x8x4xf32, #tpu.memory_space<vmem>>, vector<1x1x8x4xf32>
    %3 = vector.shape_cast %2 : vector<1x1x8x4xf32> to vector<8x4xf32>
    %4 = vector.extract_strided_slice %3 {offsets = [0, 0], sizes = [8, 2], strides = [1, 1]} : vector<8x4xf32> to vector<8x2xf32>
    %5 = vector.extract_strided_slice %3 {offsets = [0, 2], sizes = [8, 2], strides = [1, 1]} : vector<8x4xf32> to vector<8x2xf32>
    %6 = tpu.concatenate %4, %1, %5 in 1 : vector<8x2xf32>, vector<8x16xf32>, vector<8x2xf32> -> vector<8x20xf32>
    %7 = vector.extract_strided_slice %6 {offsets = [0, 0], sizes = [8, 16], strides = [1, 1]} : vector<8x20xf32> to vector<8x16xf32>
    %c0_6 = arith.constant 0 : index
    %c0_7 = arith.constant 0 : index
    %c0_8 = arith.constant 0 : index
    %8 = vector.load %arg4[%c0_6, %c0_7, %c0_8] : memref<3x16x8xf32, #tpu.memory_space<vmem>>, vector<1x16x8xf32>
    %9 = vector.shape_cast %8 : vector<1x16x8xf32> to vector<16x8xf32>
    %cst = arith.constant dense<0.000000e+00> : vector<16x16xf32>
    %10 = tpu.matmul %9, %7, %cst {dimension_numbers = #tpu.dot_dimension_numbers<[1], [0], [0], [1], [0, 0, 1, 1], [], []>} : vector<16x8xf32>, vector<8x16xf32>, vector<16x16xf32> -> vector<16x16xf32>
    %11 = vector.extract_strided_slice %6 {offsets = [0, 2], sizes = [8, 16], strides = [1, 1]} : vector<8x20xf32> to vector<8x16xf32>
    %c1 = arith.constant 1 : index
    %c0_9 = arith.constant 0 : index
    %c0_10 = arith.constant 0 : index
    %12 = vector.load %arg4[%c1, %c0_9, %c0_10] : memref<3x16x8xf32, #tpu.memory_space<vmem>>, vector<1x16x8xf32>
    %13 = vector.shape_cast %12 : vector<1x16x8xf32> to vector<16x8xf32>
    %cst_11 = arith.constant dense<0.000000e+00> : vector<16x16xf32>
    %14 = tpu.matmul %13, %11, %cst_11 {dimension_numbers = #tpu.dot_dimension_numbers<[1], [0], [0], [1], [0, 0, 1, 1], [], []>} : vector<16x8xf32>, vector<8x16xf32>, vector<16x16xf32> -> vector<16x16xf32>
    %15 = arith.addf %10, %14 : vector<16x16xf32>
    %16 = vector.extract_strided_slice %6 {offsets = [0, 4], sizes = [8, 16], strides = [1, 1]} : vector<8x20xf32> to vector<8x16xf32>
    %c2 = arith.constant 2 : index
    %c0_12 = arith.constant 0 : index
    %c0_13 = arith.constant 0 : index
    %17 = vector.load %arg4[%c2, %c0_12, %c0_13] : memref<3x16x8xf32, #tpu.memory_space<vmem>>, vector<1x16x8xf32>
    %18 = vector.shape_cast %17 : vector<1x16x8xf32> to vector<16x8xf32>
    %cst_14 = arith.constant dense<0.000000e+00> : vector<16x16xf32>
    %19 = tpu.matmul %18, %16, %cst_14 {dimension_numbers = #tpu.dot_dimension_numbers<[1], [0], [0], [1], [0, 0, 1, 1], [], []>} : vector<16x8xf32>, vector<8x16xf32>, vector<16x16xf32> -> vector<16x16xf32>
    %20 = arith.addf %15, %19 : vector<16x16xf32>
    %c0_15 = arith.constant 0 : index
    %c0_16 = arith.constant 0 : index
    %21 = vector.load %arg5[%c0_15, %c0_16] : memref<16x1xf32, #tpu.memory_space<vmem>>, vector<16x1xf32>
    %22 = vector.broadcast %21 : vector<16x1xf32> to vector<16x16xf32>
    %23 = arith.addf %20, %22 : vector<16x16xf32>
    %24 = vector.extract_strided_slice %23 {offsets = [0, 0], sizes = [8, 16], strides = [1, 1]} : vector<16x16xf32> to vector<8x16xf32>
    %25 = vector.extract_strided_slice %23 {offsets = [8, 0], sizes = [8, 16], strides = [1, 1]} : vector<16x16xf32> to vector<8x16xf32>
    %cst_17 = arith.constant 5.000000e-01 : f32
    %26 = vector.broadcast %cst_17 : f32 to vector<8x16xf32>
    %27 = arith.mulf %26, %25 : vector<8x16xf32>
    %28 = math.tanh %27 : vector<8x16xf32>
    %cst_18 = arith.constant 1.000000e+00 : f32
    %29 = vector.broadcast %cst_18 : f32 to vector<8x16xf32>
    %30 = arith.addf %29, %28 : vector<8x16xf32>
    %cst_19 = arith.constant 5.000000e-01 : f32
    %31 = vector.broadcast %cst_19 : f32 to vector<8x16xf32>
    %32 = arith.mulf %31, %30 : vector<8x16xf32>
    %33 = math.tanh %24 : vector<8x16xf32>
    %34 = arith.mulf %33, %32 : vector<8x16xf32>
    %c0_20 = arith.constant 0 : index
    %c0_21 = arith.constant 0 : index
    %c0_22 = arith.constant 0 : index
    %35 = vector.load %arg6[%c0_20, %c0_21, %c0_22] : memref<1x8x16xf32, #tpu.memory_space<vmem>>, vector<1x8x16xf32>
    %36 = vector.shape_cast %35 : vector<1x8x16xf32> to vector<8x16xf32>
    %37 = vector.shape_cast %34 : vector<8x16xf32> to vector<1x8x16xf32>
    tpu.vector_store %arg6[%c0_20, %c0_21, %c0_22], %37 {strides = array<i32>} : memref<1x8x16xf32, #tpu.memory_space<vmem>>, vector<1x8x16xf32>,
    return
  }
  func.func @transform_0(%arg0: i32, %arg1: i32) -> (i32, i32, i32) {
    %c0_i32 = arith.constant 0 : i32
    %c0_i32_0 = arith.constant 0 : i32
    return %arg0, %c0_i32, %arg1 : i32, i32, i32
  }
  func.func @transform_1(%arg0: i32, %arg1: i32) -> (i32, i32, i32, i32) {
    %c0_i32 = arith.constant 0 : i32
    %c0_i32_0 = arith.constant 0 : i32
    %c0_i32_1 = arith.constant 0 : i32
    return %arg0, %arg1, %c0_i32, %c0_i32_0 : i32, i32, i32, i32
  }
  func.func @transform_2(%arg0: i32, %arg1: i32) -> (i32, i32, i32) {
    %c0_i32 = arith.constant 0 : i32
    %c0_i32_0 = arith.constant 0 : i32
    %c0_i32_1 = arith.constant 0 : i32
    %c0_i32_2 = arith.constant 0 : i32
    return %c0_i32, %c0_i32_0, %c0_i32_1 : i32, i32, i32
  }
  func.func @transform_3(%arg0: i32, %arg1: i32) -> (i32, i32) {
    %c0_i32 = arith.constant 0 : i32
    %c0_i32_0 = arith.constant 0 : i32
    %c0_i32_1 = arith.constant 0 : i32
    return %c0_i32, %c0_i32_0 : i32, i32
  }
  func.func @transform_4(%arg0: i32, %arg1: i32) -> (i32, i32, i32) {
    %c0_i32 = arith.constant 0 : i32
    %c0_i32_0 = arith.constant 0 : i32
    return %arg0, %c0_i32, %arg1 : i32, i32, i32
  }
}

</mosaic_0001>

<llo_original>
// kernel: tpu_custom_call.1
$region0: #{tpu_custom_call.1}
  #allocation0 [shape = 'u32[]', space=smem, size = 0x4, offset = 0x4, fixed_abs, tag = 'smem constant byte address 0x4 - core index']
  #allocation1 [shape = 'u32[144,128]{1,0:T(1,128)}', space=vmem, size = 0x12000, scoped, tag = 'internal scratch']
  %s0 = inlined_call_operand.vmem [shape: f32[2,8,16], index: 0, kind: input, shape index: {}]
  %s1 = inlined_call_operand.vmem [shape: f32[2,1,8,4], index: 1, kind: input, shape index: {}]
  %s2 = inlined_call_operand.vmem [shape: f32[3,16,8], index: 2, kind: input, shape index: {}]
  %s3 = inlined_call_operand.vmem [shape: f32[16,1], index: 3, kind: input, shape index: {}]
  %s4 = inlined_call_operand.hbm [shape: f32[2,8,16], index: 4, kind: output, shape index: {}]
  %s5 = sld [smem:[#allocation0]]
  $region49: #{tpu_custom_call.1} parent=0
    _
  %s7 = ssub.s32 1, %s5
  %s8 = scalar_select 0, %s7, %s5
  $region1: #{tpu_custom_call.1} parent=0
    #allocation2 [shape = 'u8[8192]{0}', space=vmem, size = 0x2000, scoped, tag = 'output window, operand 0']
    #allocation3 [shape = 's32[2]{0}', space=sflag, size = 0x8, scoped, tag = 'scoped memory for tpu_custom_call.1']
    %9 = vsyncpa [#allocation3], 0
    %s10 = scalar_lea.sflag [#allocation3], 1
    %11 = vsyncpa %s10, 0
    loop: start=0, step=1, limit=4
    $region2: #{tpu_custom_call.1} parent=1 // loop_pre_header
      _
    $region3: #{tpu_custom_call.1} parent=1 // loop_header
      %s13 = sphi 0, %s17
      %p14 = scmp.ge.s32.totalorder %s13, 4
      %s20 = sphi 0, %s32
      %s21 = sphi 0, %s28
      %s22 = sphi 0, %s20
      %s23 = sphi 0, %s21
      %s24 = sphi 0, %s22
      %s25 = sphi 0, %s23
      %s37 = sphi 0, %s39
      %s40 = sphi 0, %s37
      %s41 = sphi 0, %s40
      %s57 = sphi 0, %s41
      %s65 = sphi 0, %s67
      %s68 = sphi 0, %s65
      %s69 = sphi 0, %s68
      %s85 = sphi 0, %s69
      %s89 = sphi 0, %s89
      %s91 = sphi 0, %s89
      %s92 = sphi 0, %s91
      %s106 = sphi 0, %s92
      %s110 = sphi 0, %s110
      %s112 = sphi 0, %s110
      %s113 = sphi 0, %s112
      %s127 = sphi 0, %s113
      %s135 = sphi 0, %s137
      %s138 = sphi 0, %s135
      %s139 = sphi 0, %s138
      %s155 = sphi 0, %s139
    $region4: #{tpu_custom_call.1} parent=1 // loop_header_branch
      %16 = sbr.rel (%p14) target = $region8
    $region5: #{tpu_custom_call.1} parent=1 // loop_body
      %s18 = ssub.s32 %s13, 1
      %s19 = ssub.s32 %s13, 2
      %s26 = sadd.s32 1, %s21
      %p27 = scmp.ge.s32.totalorder %s26, 1
      %s28 = scalar_select %p27, 0, %s26
      %s29 = sadd.s32 1, %s20
      %s30 = scalar_select %p27, %s29, %s20
      %p31 = scmp.ge.s32.totalorder %s30, 2
      %s32 = scalar_select %p31, 0, %s30
      %s33 = ssub.s32 %s20, %s32
      %s34 = ssub.s32 %s21, %s28
      %s35 = sor.u32 %s33, %s34
      %p36 = scmp.eq.s32.totalorder %s35, 0
      %s38 = sadd.s32 %s37, 1
      %s39 = scalar_select %p36, %s37, %s38
      %p42 = pneg %p36
      %p43 = scmp.eq.s32.totalorder %s13, 1
      %p44 = por %p42, %p43
      %p45 = scmp.ne.s32.totalorder %s37, %s40
      %p46 = scmp.eq.s32.totalorder %s13, 0
      %p47 = por %p45, %p46
      %p48 = scmp.ne.s32.totalorder %s37, %s40
      %p49 = scmp.eq.s32.totalorder %s18, 1
      %p50 = por %p48, %p49
      %p51 = scmp.ne.s32.totalorder %s40, %s41
      %p52 = scmp.eq.s32.totalorder %s18, 0
      %p53 = por %p51, %p52
      %p54 = scmp.ne.s32.totalorder %s40, %s41
      %p55 = scmp.eq.s32.totalorder %s19, 1
      %p56 = por %p54, %p55
      %p58 = scmp.ne.s32.totalorder %s41, %s57
      %p59 = scmp.eq.s32.totalorder %s19, 0
      %p60 = por %p58, %p59
      %s61 = ssub.s32 %s20, %s32
      %s62 = ssub.s32 %s21, %s28
      %s63 = sor.u32 %s61, %s62
      %p64 = scmp.eq.s32.totalorder %s63, 0
      %s66 = sadd.s32 %s65, 1
      %s67 = scalar_select %p64, %s65, %s66
      %p70 = pneg %p64
      %p71 = scmp.eq.s32.totalorder %s13, 1
      %p72 = por %p70, %p71
      %p73 = scmp.ne.s32.totalorder %s65, %s68
      %p74 = scmp.eq.s32.totalorder %s13, 0
      %p75 = por %p73, %p74
      %p76 = scmp.ne.s32.totalorder %s65, %s68
      %p77 = scmp.eq.s32.totalorder %s18, 1
      %p78 = por %p76, %p77
      %p79 = scmp.ne.s32.totalorder %s68, %s69
      %p80 = scmp.eq.s32.totalorder %s18, 0
      %p81 = por %p79, %p80
      %p82 = scmp.ne.s32.totalorder %s68, %s69
      %p83 = scmp.eq.s32.totalorder %s19, 1
      %p84 = por %p82, %p83
      %p86 = scmp.ne.s32.totalorder %s69, %s85
      %p87 = scmp.eq.s32.totalorder %s19, 0
      %p88 = por %p86, %p87
      %s90 = sadd.s32 %s89, 1
      %p93 = scmp.eq.s32.totalorder %s13, 1
      %p94 = scmp.ne.s32.totalorder %s89, %s91
      %p95 = scmp.eq.s32.totalorder %s13, 0
      %p96 = por %p94, %p95
      %p97 = scmp.ne.s32.totalorder %s89, %s91
      %p98 = scmp.eq.s32.totalorder %s18, 1
      %p99 = por %p97, %p98
      %p100 = scmp.ne.s32.totalorder %s91, %s92
      %p101 = scmp.eq.s32.totalorder %s18, 0
      %p102 = por %p100, %p101
      %p103 = scmp.ne.s32.totalorder %s91, %s92
      %p104 = scmp.eq.s32.totalorder %s19, 1
      %p105 = por %p103, %p104
      %p107 = scmp.ne.s32.totalorder %s92, %s106
      %p108 = scmp.eq.s32.totalorder %s19, 0
      %p109 = por %p107, %p108
      %s111 = sadd.s32 %s110, 1
      %p114 = scmp.eq.s32.totalorder %s13, 1
      %p115 = scmp.ne.s32.totalorder %s110, %s112
      %p116 = scmp.eq.s32.totalorder %s13, 0
      %p117 = por %p115, %p116
      %p118 = scmp.ne.s32.totalorder %s110, %s112
      %p119 = scmp.eq.s32.totalorder %s18, 1
      %p120 = por %p118, %p119
      %p121 = scmp.ne.s32.totalorder %s112, %s113
      %p122 = scmp.eq.s32.totalorder %s18, 0
      %p123 = por %p121, %p122
      %p124 = scmp.ne.s32.totalorder %s112, %s113
      %p125 = scmp.eq.s32.totalorder %s19, 1
      %p126 = por %p124, %p125
      %p128 = scmp.ne.s32.totalorder %s113, %s127
      %p129 = scmp.eq.s32.totalorder %s19, 0
      %p130 = por %p128, %p129
      %s131 = ssub.s32 %s20, %s32
      %s132 = ssub.s32 %s21, %s28
      %s133 = sor.u32 %s131, %s132
      %p134 = scmp.eq.s32.totalorder %s133, 0
      %s136 = sadd.s32 %s135, 1
      %s137 = scalar_select %p134, %s135, %s136
      %p140 = pneg %p134
      %p141 = scmp.eq.s32.totalorder %s13, 1
      %p142 = por %p140, %p141
      %p143 = scmp.ne.s32.totalorder %s135, %s138
      %p144 = scmp.eq.s32.totalorder %s13, 0
      %p145 = por %p143, %p144
      %p146 = scmp.ne.s32.totalorder %s135, %s138
      %p147 = scmp.eq.s32.totalorder %s18, 1
      %p148 = por %p146, %p147
      %p149 = scmp.ne.s32.totalorder %s138, %s139
      %p150 = scmp.eq.s32.totalorder %s18, 0
      %p151 = por %p149, %p150
      %p152 = scmp.ne.s32.totalorder %s138, %s139
      %p153 = scmp.eq.s32.totalorder %s19, 1
      %p154 = por %p152, %p153
      %p156 = scmp.ne.s32.totalorder %s139, %s155
      %p157 = scmp.eq.s32.totalorder %s19, 0
      %p158 = por %p156, %p157
      %p159 = scmp.le.s32.totalorder 1, %s13
      %p160 = scmp.lt.s32.totalorder %s13, 3
      %p161 = pnand %p159, %p160
      %p162 = pneg %p161
      // Predicated region
      $region9: #{tpu_custom_call.1} parent=5 // pred_check
        _
      $region10: #{tpu_custom_call.1} parent=5 // pred_check_branch
        %164 = sbr.rel (%p161) target = $region12
      $region11: #{tpu_custom_call.1} parent=5 // pred_region
        %s165 = ssub.s32 %s13, 1
        // Predicated region
        $region13: #{tpu_custom_call.1} parent=11 // pred_check
          %p166 = pneg %p102
        $region14: #{tpu_custom_call.1} parent=11 // pred_check_branch
          %168 = sbr.rel (%p166) target = $region16
        $region15: #{tpu_custom_call.1} parent=11 // pred_region
          _
        $region16: #{tpu_custom_call.1} parent=11 // pred_fallthru
          _
        // Predicated region
        $region17: #{tpu_custom_call.1} parent=11 // pred_check
          %p169 = pneg %p123
        $region18: #{tpu_custom_call.1} parent=11 // pred_check_branch
          %171 = sbr.rel (%p169) target = $region20
        $region19: #{tpu_custom_call.1} parent=11 // pred_region
          _
        $region20: #{tpu_custom_call.1} parent=11 // pred_fallthru
          _
      $region12: #{tpu_custom_call.1} parent=5 // pred_fallthru
        _
      %p172 = scmp.lt.s32.totalorder %s13, 2
      // Predicated region
      $region21: #{tpu_custom_call.1} parent=5 // pred_check
        %p173 = pneg %p172
      $region22: #{tpu_custom_call.1} parent=5 // pred_check_branch
        %175 = sbr.rel (%p173) target = $region24
      $region23: #{tpu_custom_call.1} parent=5 // pred_region
        // Predicated region
        $region25: #{tpu_custom_call.1} parent=23 // pred_check
          %p176 = pneg %p47
        $region26: #{tpu_custom_call.1} parent=23 // pred_check_branch
          %178 = sbr.rel (%p176) target = $region28
        $region27: #{tpu_custom_call.1} parent=23 // pred_region
          %p179 = scmp.lt.s32.totalorder %s20, 1
          %s180 = scalar_select %p179, %s20, 1
          %p181 = scmp.lt.s32.totalorder %s21, 0
          %s182 = scalar_select %p181, %s21, 0
          %s183 = sadd.s32 %s182, %s180
          %s184 = smul.addr %s183, 8
          %s185 = scalar_lea.vmem %s0, %s184
        $region28: #{tpu_custom_call.1} parent=23 // pred_fallthru
          _
        // Predicated region
        $region29: #{tpu_custom_call.1} parent=23 // pred_check
          %p186 = pneg %p75
        $region30: #{tpu_custom_call.1} parent=23 // pred_check_branch
          %188 = sbr.rel (%p186) target = $region32
        $region31: #{tpu_custom_call.1} parent=23 // pred_region
          %p189 = scmp.lt.s32.totalorder %s20, 1
          %s190 = scalar_select %p189, %s20, 1
          %p191 = scmp.lt.s32.totalorder %s21, 0
          %s192 = scalar_select %p191, %s21, 0
          %s193 = sadd.s32 %s192, %s190
          %s194 = smul.addr %s193, 8
          %s195 = scalar_lea.vmem %s1, %s194
        $region32: #{tpu_custom_call.1} parent=23 // pred_fallthru
          _
      $region24: #{tpu_custom_call.1} parent=5 // pred_fallthru
        _
      %p196 = scmp.le.s32.totalorder 1, %s13
      %p197 = scmp.lt.s32.totalorder %s13, 3
      %p198 = pnand %p196, %p197
      %p199 = pneg %p198
      // Predicated region
      $region33: #{tpu_custom_call.1} parent=5 // pred_check
        _
      $region34: #{tpu_custom_call.1} parent=5 // pred_check_branch
        %201 = sbr.rel (%p198) target = $region36
      $region35: #{tpu_custom_call.1} parent=5 // pred_region
        %s202 = ssub.s32 %s13, 1
        %p203 = scmp.lt.s32.totalorder %s22, 1
        %s204 = scalar_select %p203, %s22, 1
        %p205 = scmp.lt.s32.totalorder %s23, 0
        %s206 = scalar_select %p205, %s23, 0
        %s207 = sadd.s32 %s206, %s204
        %s208 = smul.addr %s207, 8
        %s209 = scalar_lea.vmem %s0, %s208
        %p210 = pneg %p53
        %p211 = pneg %p50
        %p212 = scmp.lt.s32.totalorder %s22, 1
        %s213 = scalar_select %p212, %s22, 1
        %p214 = scmp.lt.s32.totalorder %s23, 0
        %s215 = scalar_select %p214, %s23, 0
        %s216 = sadd.s32 %s215, %s213
        %s217 = smul.addr %s216, 8
        %s218 = scalar_lea.vmem %s1, %s217
        %p219 = pneg %p81
        %p220 = pneg %p78
        %p221 = pneg %p102
        %p222 = pneg %p99
        %p223 = pneg %p123
        %p224 = pneg %p120
        %p225 = pneg %p151
        %p226 = pneg %p148
        %s227 = sand.u32 %s138, 1
        %s228 = scalar_lea.sflag [#allocation3], %s227
        %s229 = sand.u32 %s138, 1
        %s230 = smul.addr %s229, 8
        %s231 = scalar_lea.vmem [#allocation2], %s230
        %p232 = scmp.lt.s32.totalorder %s22, 1
        %s233 = scalar_select %p232, %s22, 1
        %p234 = scmp.lt.s32.totalorder %s23, 0
        %s235 = scalar_select %p234, %s23, 0
        %s236 = sadd.s32 %s235, %s233
        %s237 = smul.addr %s236, 8
        %s238 = scalar_lea.vmem %s0, %s237
        %p239 = scmp.lt.s32.totalorder %s22, 1
        %s240 = scalar_select %p239, %s22, 1
        %p241 = scmp.lt.s32.totalorder %s23, 0
        %s242 = scalar_select %p241, %s23, 0
        %s243 = sadd.s32 %s242, %s240
        %s244 = smul.addr %s243, 8
        %s245 = scalar_lea.vmem %s1, %s244
        %v246 = vld [vmem:[%s238] sm:$0xff]
        %v247 = vld [vmem:[%s245] sm:$0xff]
        %249 = vrot.lane.b32.xlu0 %v246, 2
        %v250 = vpop.permute.xlu0 %249
        %253 = vrot.lane.b32.xlu0 %v247, 16
        %v254 = vpop.permute.xlu0 %253
        %vm256 = vcmask 15360
        %v257 = vsel %vm256, %v247, %v250
        %vm258 = vcmask 146432
        %v259 = vsel %vm258, %v257, %v254
        %v260 = vld [vmem:[%s2] sm:$0xff]
        %v261 = vld [vmem:[%s2 + $0x8] sm:$0xff]
        %s262 = scalar_lea.vmem %s2, 16
        %v263 = vld [vmem:[%s262] sm:$0xff]
        %v264 = vld [vmem:[%s262 + $0x8] sm:$0xff]
        %266 = vrot.lane.b32.xlu0 %v259, 126
        %v267 = vpop.permute.xlu0 %266
        %vm269 = vcmask 64512
        %v271 = vsel %vm269, %v263, 0
        %v274 = vsel %vm269, %v264, 0
        %276 = vmatprep.subr.mxu0 0.0
        %277 = vmatpush1.msra.mxu0 %v267
        %278 = vmatprep.subr.mxu0 0.0
        %279 = vmatpush1.msra.mxu0 0.0
        %280 = vmatprep.subr.mxu0 0.0
        %281 = vmatpush1.msra.mxu0 0.0
        %282 = vmatprep.subr.mxu0 0.0
        %283 = vmatpush1.msra.mxu0 0.0
        %284 = vmatprep.subr.mxu0 0.0
        %285 = vmatpush1.msra.mxu0 0.0
        %286 = vmatprep.subr.mxu0 0.0
        %287 = vmatpush1.msra.mxu0 0.0
        %288 = vmatprep.subr.mxu0 0.0
        %289 = vmatpush1.msra.mxu0 0.0
        %290 = vmatprep.subr.mxu0 0.0
        %291 = vmatpush1.msra.mxu0 0.0
        %292 = vmatprep.subr.mxu0 0.0
        %293 = vmatpush1.msra.mxu0 0.0
        %294 = vmatprep.subr.mxu0 0.0
        %295 = vmatpush1.msra.mxu0 0.0
        %296 = vmatprep.subr.mxu0 0.0
        %297 = vmatpush1.msra.mxu0 0.0
        %298 = vmatprep.subr.mxu0 0.0
        %299 = vmatpush1.msra.mxu0 0.0
        %300 = vmatprep.subr.mxu0 0.0
        %301 = vmatpush1.msra.mxu0 0.0
        %302 = vmatprep.subr.mxu0 0.0
        %303 = vmatpush1.msra.mxu0 0.0
        %304 = vmatprep.subr.mxu0 0.0
        %305 = vmatpush1.msra.mxu0 0.0
        %306 = vmatprep.subr.mxu0 0.0
        %307 = vmatpush1.msra.mxu0 0.0
        %308 = vmatprep.subr.mxu0 0.0
        %309 = vmatpush1.msra.mxu0 0.0
        %310 = vmatprep.subr.mxu0 0.0
        %311 = vmatpush1.msra.mxu0 0.0
        %312 = vmatprep.subr.mxu0 0.0
        %313 = vmatpush1.msra.mxu0 0.0
        %314 = vmatprep.subr.mxu0 0.0
        %315 = vmatpush1.msra.mxu0 0.0
        %316 = vmatprep.subr.mxu0 0.0
        %317 = vmatpush1.msra.mxu0 0.0
        %318 = vmatprep.subr.mxu0 0.0
        %319 = vmatpush1.msra.mxu0 0.0
        %320 = vmatprep.subr.mxu0 0.0
        %321 = vmatpush1.msra.mxu0 0.0
        %322 = vmatprep.subr.mxu0 0.0
        %323 = vmatpush1.msra.mxu0 0.0
        %324 = vmatprep.subr.mxu0 0.0
        %325 = vmatpush1.msra.mxu0 0.0
        %326 = vmatprep.subr.mxu0 0.0
        %327 = vmatpush1.msra.mxu0 0.0
        %328 = vmatprep.subr.mxu0 0.0
        %329 = vmatpush1.msra.mxu0 0.0
        %330 = vmatprep.subr.mxu0 0.0
        %331 = vmatpush1.msra.mxu0 0.0
        %332 = vmatprep.subr.mxu0 0.0
        %333 = vmatpush1.msra.mxu0 0.0
        %334 = vmatprep.subr.mxu0 0.0
        %335 = vmatpush1.msra.mxu0 0.0
        %336 = vmatprep.subr.mxu0 0.0
        %337 = vmatpush1.msra.mxu0 0.0
        %338 = vmatprep.subr.mxu0 0.0
        %339 = vmatpush1.msra.mxu0 0.0
        %340 = vmatprep.mubr.f32.mxu0 0.0
        %341 = vmatmul.mubr.f32.gmra.mrb[0].mxu0 %v271
        %v342 = vpop.f32.mrb[0].mxu0
        %v343 = vadd.f32 0.0, %v342
        %v344 = vpop.f32.mrb[0].mxu0
        %345 = vmatprep.mubr.f32.mxu0 0.0
        %346 = vmatmul.mubr.f32.gmra.mrb[0].mxu0 %v274
        %v347 = vpop.f32.mrb[0].mxu0
        %v348 = vadd.f32 0.0, %v347
        %v349 = vpop.f32.mrb[0].mxu0
        %350 = vdwg.mxu0
        %v352 = vsel %vm269, %v260, 0
        %v355 = vsel %vm269, %v261, 0
        %357 = vmatprep.subr.mxu0 0.0
        %358 = vmatpush1.msra.mxu0 %v259
        %359 = vmatprep.subr.mxu0 0.0
        %360 = vmatpush1.msra.mxu0 0.0
        %361 = vmatprep.subr.mxu0 0.0
        %362 = vmatpush1.msra.mxu0 0.0
        %363 = vmatprep.subr.mxu0 0.0
        %364 = vmatpush1.msra.mxu0 0.0
        %365 = vmatprep.subr.mxu0 0.0
        %366 = vmatpush1.msra.mxu0 0.0
        %367 = vmatprep.subr.mxu0 0.0
        %368 = vmatpush1.msra.mxu0 0.0
        %369 = vmatprep.subr.mxu0 0.0
        %370 = vmatpush1.msra.mxu0 0.0
        %371 = vmatprep.subr.mxu0 0.0
        %372 = vmatpush1.msra.mxu0 0.0
        %373 = vmatprep.subr.mxu0 0.0
        %374 = vmatpush1.msra.mxu0 0.0
        %375 = vmatprep.subr.mxu0 0.0
        %376 = vmatpush1.msra.mxu0 0.0
        %377 = vmatprep.subr.mxu0 0.0
        %378 = vmatpush1.msra.mxu0 0.0
        %379 = vmatprep.subr.mxu0 0.0
        %380 = vmatpush1.msra.mxu0 0.0
        %381 = vmatprep.subr.mxu0 0.0
        %382 = vmatpush1.msra.mxu0 0.0
        %383 = vmatprep.subr.mxu0 0.0
        %384 = vmatpush1.msra.mxu0 0.0
        %385 = vmatprep.subr.mxu0 0.0
        %386 = vmatpush1.msra.mxu0 0.0
        %387 = vmatprep.subr.mxu0 0.0
        %388 = vmatpush1.msra.mxu0 0.0
        %389 = vmatprep.subr.mxu0 0.0
        %390 = vmatpush1.msra.mxu0 0.0
        %391 = vmatprep.subr.mxu0 0.0
        %392 = vmatpush1.msra.mxu0 0.0
        %393 = vmatprep.subr.mxu0 0.0
        %394 = vmatpush1.msra.mxu0 0.0
        %395 = vmatprep.subr.mxu0 0.0
        %396 = vmatpush1.msra.mxu0 0.0
        %397 = vmatprep.subr.mxu0 0.0
        %398 = vmatpush1.msra.mxu0 0.0
        %399 = vmatprep.subr.mxu0 0.0
        %400 = vmatpush1.msra.mxu0 0.0
        %401 = vmatprep.subr.mxu0 0.0
        %402 = vmatpush1.msra.mxu0 0.0
        %403 = vmatprep.subr.mxu0 0.0
        %404 = vmatpush1.msra.mxu0 0.0
        %405 = vmatprep.subr.mxu0 0.0
        %406 = vmatpush1.msra.mxu0 0.0
        %407 = vmatprep.subr.mxu0 0.0
        %408 = vmatpush1.msra.mxu0 0.0
        %409 = vmatprep.subr.mxu0 0.0
        %410 = vmatpush1.msra.mxu0 0.0
        %411 = vmatprep.subr.mxu0 0.0
        %412 = vmatpush1.msra.mxu0 0.0
        %413 = vmatprep.subr.mxu0 0.0
        %414 = vmatpush1.msra.mxu0 0.0
        %415 = vmatprep.subr.mxu0 0.0
        %416 = vmatpush1.msra.mxu0 0.0
        %417 = vmatprep.subr.mxu0 0.0
        %418 = vmatpush1.msra.mxu0 0.0
        %419 = vmatprep.subr.mxu0 0.0
        %420 = vmatpush1.msra.mxu0 0.0
        %421 = vmatprep.mubr.f32.mxu0 0.0
        %422 = vmatmul.mubr.f32.gmra.mrb[0].mxu0 %v352
        %v423 = vpop.f32.mrb[0].mxu0
        %v424 = vadd.f32 %v343, %v423
        %v425 = vpop.f32.mrb[0].mxu0
        %426 = vmatprep.mubr.f32.mxu0 0.0
        %427 = vmatmul.mubr.f32.gmra.mrb[0].mxu0 %v355
        %v428 = vpop.f32.mrb[0].mxu0
        %v429 = vadd.f32 %v348, %v428
        %v430 = vpop.f32.mrb[0].mxu0
        %431 = vdwg.mxu0
        %s432 = scalar_lea.vmem %s2, 32
        %v433 = vld [vmem:[%s432] sm:$0xff]
        %v434 = vld [vmem:[%s432 + $0x8] sm:$0xff]
        %435 = vrot.lane.b32.xlu0 %v259, 124
        %v436 = vpop.permute.xlu0 %435
        %v439 = vsel %vm269, %v433, 0
        %v442 = vsel %vm269, %v434, 0
        %444 = vmatprep.subr.mxu0 0.0
        %445 = vmatpush1.msra.mxu0 %v436
        %446 = vmatprep.subr.mxu0 0.0
        %447 = vmatpush1.msra.mxu0 0.0
        %448 = vmatprep.subr.mxu0 0.0
        %449 = vmatpush1.msra.mxu0 0.0
        %450 = vmatprep.subr.mxu0 0.0
        %451 = vmatpush1.msra.mxu0 0.0
        %452 = vmatprep.subr.mxu0 0.0
        %453 = vmatpush1.msra.mxu0 0.0
        %454 = vmatprep.subr.mxu0 0.0
        %455 = vmatpush1.msra.mxu0 0.0
        %456 = vmatprep.subr.mxu0 0.0
        %457 = vmatpush1.msra.mxu0 0.0
        %458 = vmatprep.subr.mxu0 0.0
        %459 = vmatpush1.msra.mxu0 0.0
        %460 = vmatprep.subr.mxu0 0.0
        %461 = vmatpush1.msra.mxu0 0.0
        %462 = vmatprep.subr.mxu0 0.0
        %463 = vmatpush1.msra.mxu0 0.0
        %464 = vmatprep.subr.mxu0 0.0
        %465 = vmatpush1.msra.mxu0 0.0
        %466 = vmatprep.subr.mxu0 0.0
        %467 = vmatpush1.msra.mxu0 0.0
        %468 = vmatprep.subr.mxu0 0.0
        %469 = vmatpush1.msra.mxu0 0.0
        %470 = vmatprep.subr.mxu0 0.0
        %471 = vmatpush1.msra.mxu0 0.0
        %472 = vmatprep.subr.mxu0 0.0
        %473 = vmatpush1.msra.mxu0 0.0
        %474 = vmatprep.subr.mxu0 0.0
        %475 = vmatpush1.msra.mxu0 0.0
        %476 = vmatprep.subr.mxu0 0.0
        %477 = vmatpush1.msra.mxu0 0.0
        %478 = vmatprep.subr.mxu0 0.0
        %479 = vmatpush1.msra.mxu0 0.0
        %480 = vmatprep.subr.mxu0 0.0
        %481 = vmatpush1.msra.mxu0 0.0
        %482 = vmatprep.subr.mxu0 0.0
        %483 = vmatpush1.msra.mxu0 0.0
        %484 = vmatprep.subr.mxu0 0.0
        %485 = vmatpush1.msra.mxu0 0.0
        %486 = vmatprep.subr.mxu0 0.0
        %487 = vmatpush1.msra.mxu0 0.0
        %488 = vmatprep.subr.mxu0 0.0
        %489 = vmatpush1.msra.mxu0 0.0
        %490 = vmatprep.subr.mxu0 0.0
        %491 = vmatpush1.msra.mxu0 0.0
        %492 = vmatprep.subr.mxu0 0.0
        %493 = vmatpush1.msra.mxu0 0.0
        %494 = vmatprep.subr.mxu0 0.0
        %495 = vmatpush1.msra.mxu0 0.0
        %496 = vmatprep.subr.mxu0 0.0
        %497 = vmatpush1.msra.mxu0 0.0
        %498 = vmatprep.subr.mxu0 0.0
        %499 = vmatpush1.msra.mxu0 0.0
        %500 = vmatprep.subr.mxu0 0.0
        %501 = vmatpush1.msra.mxu0 0.0
        %502 = vmatprep.subr.mxu0 0.0
        %503 = vmatpush1.msra.mxu0 0.0
        %504 = vmatprep.subr.mxu0 0.0
        %505 = vmatpush1.msra.mxu0 0.0
        %506 = vmatprep.subr.mxu0 0.0
        %507 = vmatpush1.msra.mxu0 0.0
        %508 = vmatprep.mubr.f32.mxu0 0.0
        %509 = vmatmul.mubr.f32.gmra.mrb[0].mxu0 %v439
        %v510 = vpop.f32.mrb[0].mxu0
        %v511 = vadd.f32 0.0, %v510
        %v512 = vpop.f32.mrb[0].mxu0
        %513 = vmatprep.mubr.f32.mxu0 0.0
        %514 = vmatmul.mubr.f32.gmra.mrb[0].mxu0 %v442
        %v515 = vpop.f32.mrb[0].mxu0
        %v516 = vadd.f32 0.0, %v515
        %v517 = vpop.f32.mrb[0].mxu0
        %518 = vdwg.mxu0
        %v519 = vadd.f32 %v424, %v511
        %v520 = vadd.f32 %v429, %v516
        %v521 = vld [vmem:[%s3] sm:$0xff]
        %v522 = vld [vmem:[%s3 + $0x8] sm:$0xff]
        %524 = vset.pattern.permute.xlu0 0
        %525 = vperm.xlu0 %524, %v521
        %v526 = vpop.permute.xlu0 %525
        %529 = vset.pattern.permute.xlu0 0
        %530 = vperm.xlu0 %529, %v522
        %v531 = vpop.permute.xlu0 %530
        %v533 = vadd.f32 %v519, %v526
        %v534 = vadd.f32 %v520, %v531
        %v535 = vmul.f32 %v534, 0.5
        %v536 = vtanh.pop %v535
        %v537 = vadd.f32 %v536, 1.0
        %v538 = vmul.f32 %v537, 0.5
        %v539 = vtanh.pop %v533
        %v540 = vmul.f32 %v539, %v538
        %vm541 = vcmask 130048
        %542 = vst.msk [vmem:[%s231] sm:$0xff] %vm541, %v540
        %s543 = sand.u32 %s138, 1
        %s544 = scalar_lea.sflag [#allocation3], %s543
        %s545 = sand.u32 %s138, 1
        %s546 = smul.addr %s545, 8
        %s547 = scalar_lea.vmem [#allocation2], %s546
        // Predicated region
        $region37: #{tpu_custom_call.1} parent=35 // pred_check
          %p548 = pneg %p148
        $region38: #{tpu_custom_call.1} parent=35 // pred_check_branch
          %550 = sbr.rel (%p548) target = $region40
        $region39: #{tpu_custom_call.1} parent=35 // pred_region
          %s552 = ssub.s32 128, 128
          %553 = vsyncadd %s544, %s552
          %s554 = sadd.s32 %s23, %s22
          %s555 = smul.addr %s554, 128
          %s556 = scalar_lea.hbm %s4, %s555
          %s558 = sshll.u32 %s547, 4
          %s559 = int_to_ptr.vmem [resolvable:$true] %s558
          %561 = dma.vmem_to_hbm [thread:$0]  %s559, 128, %s556, %s544
        $region40: #{tpu_custom_call.1} parent=35 // pred_fallthru
          _
      $region36: #{tpu_custom_call.1} parent=5 // pred_fallthru
        _
      %p562 = scmp.le.s32.totalorder 2, %s13
      // Predicated region
      $region41: #{tpu_custom_call.1} parent=5 // pred_check
        %p563 = pneg %p562
      $region42: #{tpu_custom_call.1} parent=5 // pred_check_branch
        %565 = sbr.rel (%p563) target = $region44
      $region43: #{tpu_custom_call.1} parent=5 // pred_region
        %s566 = ssub.s32 %s13, 2
        // Predicated region
        $region45: #{tpu_custom_call.1} parent=43 // pred_check
          %p567 = pneg %p154
        $region46: #{tpu_custom_call.1} parent=43 // pred_check_branch
          %569 = sbr.rel (%p567) target = $region48
        $region47: #{tpu_custom_call.1} parent=43 // pred_region
          %s570 = sand.u32 %s139, 1
          %s571 = scalar_lea.sflag [#allocation3], %s570
          %s572 = sand.u32 %s139, 1
          %s573 = smul.addr %s572, 8
          %s574 = scalar_lea.vmem [#allocation2], %s573
          %575 = dma.done %s571, 128
        $region48: #{tpu_custom_call.1} parent=43 // pred_fallthru
          _
      $region44: #{tpu_custom_call.1} parent=5 // pred_fallthru
        _
    $region6: #{tpu_custom_call.1} parent=1 // loop_footer
      %s17 = sadd.s32 1, %s13
    $region7: #{tpu_custom_call.1} parent=1 // loop_footer_branch
      %12 = sbr.rel target = $region3
    $region8: #{tpu_custom_call.1} parent=1 // loop_exit
      _
    %576 = vsyncpa [#allocation3], 1
    %s577 = scalar_lea.sflag [#allocation3], 1
    %578 = vsyncpa %s577, 1

</llo_original>
